<compile_context>
chip_gen: v7x
topology: tpu7x:2x2x1
jax: 0.10.0
libtpu: 0.0.40
codegen_flags: <defaults>
</compile_context>

<pallas_src>
import functools
import math

import numpy as np
import jax
import jax.numpy as jnp
from jax.experimental import pallas as pl
from jax.experimental.pallas import tpu as pltpu


# ------------------------------------------------------------------ config

_TIME_TILE_CAP = 512              # rows per time tile: keeps double-buffered f32
                                  # tiles well under v7x's 32 MiB scoped VMEM.
_VMEM_LIMIT = 48 * 1024 * 1024    # < 64 MiB physical on v7x, < 128 MiB v5e/v6e.


def _pick_time_tile(T_out, halo):
    """Largest multiple-of-8 divisor of T_out usable as a time tile
    (>= halo, >= 32, <= cap, and giving at least 2 tiles).
    Returns None -> single whole-sequence block (small inputs / odd lengths)."""
    if T_out % 8 != 0:
        return None
    limit = min(_TIME_TILE_CAP, T_out // 2)
    best = None
    tt = 8
    while tt <= limit:
        if T_out % tt == 0 and tt >= halo and tt >= 32:
            best = tt
        tt += 8
    return best


def _snake_rows(v, a_row):
    # x + (1/a) * sin(a*x)^2 ; `a_row` is (1, C).  (No epsilon: matches the
    # reference module exactly; alphas are initialised away from zero.)
    s = jnp.sin(a_row * v)
    return v + s * s * (1.0 / a_row)


# ------------------------------------------------------------------ fused conv kernel

@functools.lru_cache(maxsize=None)
def _conv_call(B, T_out, TT, Ci, Co, K, dil, activation, neg_slope,
               pre_snake, has_res, fuse_taps):
    """Conv1d (stride 1, arbitrary dilation) with fused prologue/epilogue.

    tiled (TT is not None): grid (B, nT); the input is passed twice
    (current tile + next tile) so the halo is covered with blocked BlockSpecs.
    untiled: grid (B,), whole padded sequence per batch element."""
    halo = dil * (K - 1)
    tiled = TT is not None
    Tt = TT if tiled else T_out
    KC = K * Ci

    def kernel(*refs):
        idx = 0
        x_cur = refs[idx]; idx += 1
        x_nxt = None
        if tiled:
            x_nxt = refs[idx]; idx += 1
        w_ref = refs[idx]; idx += 1
        b_ref = refs[idx]; idx += 1
        apre_ref = refs[idx]; idx += 1
        apost_ref = refs[idx]; idx += 1
        res_ref = None
        if has_res:
            res_ref = refs[idx]; idx += 1
        o_ref = refs[idx]

        if tiled:
            cur = x_cur[0]                                   # (TT, Ci)
            if halo > 0:
                xw = jnp.concatenate([cur, x_nxt[0][:halo]], axis=0)
            else:
                xw = cur
        else:
            xw = x_cur[0]                                    # (T_out + halo, Ci)

        if pre_snake:                                        # fused snake prologue
            xw = _snake_rows(xw, apre_ref[...])

        xw = xw.astype(jnp.bfloat16)                         # bf16 at the MXU

        if fuse_taps and K > 1:
            # Fold the K taps into one MXU contraction over K*Ci (im2col in VMEM).
            cols = jnp.concatenate(
                [xw[k * dil:k * dil + Tt, :] for k in range(K)], axis=-1)
            acc = jnp.dot(cols, w_ref[...], preferred_element_type=jnp.float32)
        else:
            # Channel depth already fills the MXU; per-tap dots.
            acc = jnp.dot(xw[0:Tt, :], w_ref[0:Ci, :],
                          preferred_element_type=jnp.float32)
            for k in range(1, K):
                acc = acc + jnp.dot(xw[k * dil:k * dil + Tt, :],
                                    w_ref[k * Ci:(k + 1) * Ci, :],
                                    preferred_element_type=jnp.float32)

        acc = acc + b_ref[...]
        if activation == "leaky_relu":                       # nn.LeakyReLU() default 0.01
            acc = jnp.where(acc >= 0, acc, neg_slope * acc)
        elif activation == "snake":
            acc = _snake_rows(acc, apost_ref[...])
        elif activation == "tanh":
            acc = jnp.tanh(acc)
        if has_res:                                          # fused residual add
            acc = acc + res_ref[0]
        o_ref[0] = acc

    if tiled:
        nT = T_out // TT
        in_specs = [
            pl.BlockSpec((1, TT, Ci), lambda b, t: (b, t, 0)),
            pl.BlockSpec((1, TT, Ci), lambda b, t: (b, t + 1, 0)),
            pl.BlockSpec((KC, Co), lambda b, t: (0, 0)),
            pl.BlockSpec((1, Co), lambda b, t: (0, 0)),
            pl.BlockSpec((1, Ci), lambda b, t: (0, 0)),
            pl.BlockSpec((1, Co), lambda b, t: (0, 0)),
        ]
        if has_res:
            in_specs.append(pl.BlockSpec((1, TT, Co), lambda b, t: (b, t, 0)))
        out_specs = pl.BlockSpec((1, TT, Co), lambda b, t: (b, t, 0))
        grid = (B, nT)
        sem = ("parallel", "parallel")
    else:
        in_specs = [
            pl.BlockSpec((1, T_out + halo, Ci), lambda b: (b, 0, 0)),
            pl.BlockSpec((KC, Co), lambda b: (0, 0)),
            pl.BlockSpec((1, Co), lambda b: (0, 0)),
            pl.BlockSpec((1, Ci), lambda b: (0, 0)),
            pl.BlockSpec((1, Co), lambda b: (0, 0)),
        ]
        if has_res:
            in_specs.append(pl.BlockSpec((1, T_out, Co), lambda b: (b, 0, 0)))
        out_specs = pl.BlockSpec((1, T_out, Co), lambda b: (b, 0, 0))
        grid = (B,)
        sem = ("parallel",)

    return pl.pallas_call(
        kernel,
        out_shape=jax.ShapeDtypeStruct((B, T_out, Co), jnp.float32),
        grid=grid, in_specs=in_specs, out_specs=out_specs,
        compiler_params=pltpu.CompilerParams(
            dimension_semantics=sem, vmem_limit_bytes=_VMEM_LIMIT))


def conv1d(x, w, b=None, *, dilation=1, pad_left=0, pad_right=0,
           activation=None, neg_slope=0.01, alpha_pre=None, alpha_post=None,
           residual=None):
    """x: (B, T, Ci) f32;  w: (K, Ci, Co);  b: (Co,) or None.
    Optional fused snake prologue (alpha_pre), activation epilogue
    (leaky_relu / snake(alpha_post) / tanh) and residual add."""
    B, T, Ci = x.shape
    K, Ci_w, Co = w.shape
    assert Ci_w == Ci
    halo = dilation * (K - 1)
    T_out = T + pad_left + pad_right - halo
    assert T_out > 0

    TT = _pick_time_tile(T_out, halo)
    fuse_taps = Ci < 128

    w2 = w.reshape(K * Ci, Co).astype(jnp.bfloat16)
    bias = (b if b is not None else jnp.zeros((Co,), jnp.float32))
    bias = bias.reshape(1, Co).astype(jnp.float32)
    a_pre = (alpha_pre if alpha_pre is not None else jnp.ones((Ci,), jnp.float32))
    a_pre = a_pre.reshape(1, Ci).astype(jnp.float32)
    a_post = (alpha_post if alpha_post is not None else jnp.ones((Co,), jnp.float32))
    a_post = a_post.reshape(1, Co).astype(jnp.float32)
    pre_snake = alpha_pre is not None
    has_res = residual is not None

    if TT is None:
        xp = jnp.pad(x, ((0, 0), (pad_left, pad_right), (0, 0)))
        call = _conv_call(B, T_out, None, Ci, Co, K, dilation, activation,
                          float(neg_slope), pre_snake, has_res, fuse_taps)
        args = [xp, w2, bias, a_pre, a_post]
    else:
        nT = T_out // TT
        total = (nT + 1) * TT                      # extra tile so t+1 always exists
        xp = jnp.pad(x, ((0, 0), (pad_left, total - pad_left - T), (0, 0)))
        call = _conv_call(B, T_out, TT, Ci, Co, K, dilation, activation,
                          float(neg_slope), pre_snake, has_res, fuse_taps)
        args = [xp, xp, w2, bias, a_pre, a_post]   # same array: current + next tile
    if has_res:
        args.append(residual)
    return call(*args)


# ------------------------------------------------------------------ polyphase ConvTranspose1d

def conv_transpose1d(x, w_t, b, *, stride, padding, alpha_pre=None):
    """ConvTranspose1d via polyphase decomposition (no zero insertion).
    x: (B, T, Ci);  w_t: PyTorch layout (Ci, Co, K);  b: (Co,).
    All `stride` phase sub-filters are merged into one (K_eff, Ci, stride*Co)
    weight so a single Pallas conv computes every phase; phase interleave is a
    free contiguous reshape.  NOTE: assumes (K - stride) even, as in the hps."""
    B, T, Ci = x.shape
    Ci_w, Co, K = w_t.shape
    assert Ci_w == Ci
    u, p = int(stride), int(padding)

    phase_info = []
    A = 0
    Bmax = 0
    for r in range(u):
        rp = (r + p) % u
        S = ((K - rp) + u - 1) // u if rp < K else 0
        off = (r + p - rp) // u
        phase_info.append((rp, S, off))
        if S > 0:
            A = max(A, S - 1 - off)
            Bmax = max(Bmax, off)
    K_eff = A + Bmax + 1

    W_all = jnp.zeros((K_eff, Ci, u * Co), w_t.dtype)
    for r, (rp, S, off) in enumerate(phase_info):
        for k in range(K_eff):
            s = off - (k - A)
            if 0 <= s < S:
                j = rp + u * s
                W_all = W_all.at[k, :, r * Co:(r + 1) * Co].set(w_t[:, :, j])
    bias_all = jnp.tile(b.reshape(1, Co), (1, u)).reshape(u * Co)

    y = conv1d(x, W_all, bias_all, dilation=1, pad_left=A, pad_right=Bmax,
               alpha_pre=alpha_pre)                 # snake(alphas[i]) fused as prologue
    # (B, T, u*Co) -> (B, T*u, Co): contiguous, no data movement.
    return y.reshape(B, T * u, Co)


# ------------------------------------------------------------------ kaiser-window resampling

def _kaiser_resample_filter(orig, new, lowpass_width=12, rolloff=0.5,
                            beta=4.663800127934911):
    """torchaudio _get_sinc_resample_kernel, kaiser window."""
    g = math.gcd(int(orig), int(new))
    orig, new = int(orig) // g, int(new) // g
    base_freq = min(orig, new) * rolloff
    width = int(math.ceil(lowpass_width * orig / base_freq))
    idx = np.arange(-width, width + orig, dtype=np.float64) / orig
    t = np.arange(0, -new, -1, dtype=np.float64)[:, None] / new + idx[None, :]
    t = t * base_freq
    t = np.clip(t, -lowpass_width, lowpass_width)
    window = np.i0(beta * np.sqrt(np.clip(1.0 - (t / lowpass_width) ** 2, 0.0, None)))
    window = window / np.i0(beta)
    t = t * math.pi
    scale = base_freq / orig
    sinc = np.where(t == 0, 1.0, np.sin(t) / np.where(t == 0, 1.0, t))
    kern = (sinc * window * scale).astype(np.float32)    # (new, L)
    return kern, width, orig, new


_FILTERS = {
    "up2": _kaiser_resample_filter(1, 2),    # only the ratio matters
    "down2": _kaiser_resample_filter(2, 1),
}


@functools.lru_cache(maxsize=None)
def _banded_fir_matrix(filt_key, TF):
    """Banded matrix M: out[f] = sum_j x_pad[f*orig + j] * kern[p, j]  ->
    out = M[p] @ x_window.  Stride and taps are folded into the band."""
    kern, width, orig, new = _FILTERS[filt_key]
    P, L = kern.shape
    W_in = (TF - 1) * orig + L
    M = np.zeros((P, TF, W_in), np.float32)
    for p in range(P):
        for f in range(TF):
            M[p, f, f * orig:f * orig + L] = kern[p]
    return jnp.asarray(M)


@functools.lru_cache(maxsize=None)
def _fir_call(B, C, F, TF, orig, P, W_in, post_snake):
    """Strided polyphase FIR as an MXU matmul against a banded tap matrix.
    Writes all P phases interleaved (output array (B, F, P, C))."""
    tiled = TF is not None
    TFe = TF if tiled else F
    blk_in = TF * orig if tiled else W_in

    def kernel(*refs):
        if tiled:
            x_cur, x_nxt, m_ref, a_ref, o_ref = refs
            xw = jnp.concatenate([x_cur[0], x_nxt[0][:W_in - blk_in]], axis=0)
        else:
            x_cur, m_ref, a_ref, o_ref = refs
            xw = x_cur[0]
        if post_snake:
            a_row = a_ref[...]
        for p in range(P):
            acc = jnp.dot(m_ref[p], xw, preferred_element_type=jnp.float32)
            if post_snake:                       # fused snake(a1) epilogue
                acc = _snake_rows(acc, a_row)
            o_ref[0, :, p, :] = acc

    if tiled:
        nT = F // TF
        in_specs = [
            pl.BlockSpec((1, blk_in, C), lambda b, t: (b, t, 0)),
            pl.BlockSpec((1, blk_in, C), lambda b, t: (b, t + 1, 0)),
            pl.BlockSpec((P, TF, W_in), lambda b, t: (0, 0, 0)),
            pl.BlockSpec((1, C), lambda b, t: (0, 0)),
        ]
        out_specs = pl.BlockSpec((1, TF, P, C), lambda b, t: (b, t, 0, 0))
        grid = (B, nT)
        sem = ("parallel", "parallel")
    else:
        in_specs = [
            pl.BlockSpec((1, W_in, C), lambda b: (b, 0, 0)),
            pl.BlockSpec((P, F, W_in), lambda b: (0, 0, 0)),
            pl.BlockSpec((1, C), lambda b: (0, 0)),
        ]
        out_specs = pl.BlockSpec((1, F, P, C), lambda b: (b, 0, 0, 0))
        grid = (B,)
        sem = ("parallel",)

    return pl.pallas_call(
        kernel,
        out_shape=jax.ShapeDtypeStruct((B, F, P, C), jnp.float32),
        grid=grid, in_specs=in_specs, out_specs=out_specs,
        compiler_params=pltpu.CompilerParams(
            dimension_semantics=sem, vmem_limit_bytes=_VMEM_LIMIT))


def kaiser_resample(x, filt_key, alpha_post=None):
    """x: (B, T, C) -> resampled along T (per channel), optional fused snake."""
    kern, width, orig, new = _FILTERS[filt_key]
    P, L = kern.shape
    B, T, C = x.shape
    assert T % orig == 0
    F = T // orig                                 # output frames per phase
    halo_frames = -(-(L - orig) // orig)
    TF = _pick_time_tile(F, halo_frames)

    post_snake = alpha_post is not None
    a = (alpha_post if post_snake else jnp.ones((C,), jnp.float32))
    a = a.reshape(1, C).astype(jnp.float32)

    if TF is None:
        W_in = (F - 1) * orig + L
        xp = jnp.pad(x, ((0, 0), (width, W_in - width - T), (0, 0)))
        M = _banded_fir_matrix(filt_key, F)
        call = _fir_call(B, C, F, None, orig, P, W_in, post_snake)
        out4 = call(xp, M, a)
    else:
        nT = F // TF
        W_in = (TF - 1) * orig + L
        total = (nT + 1) * TF * orig
        xp = jnp.pad(x, ((0, 0), (width, total - width - T), (0, 0)))
        M = _banded_fir_matrix(filt_key, TF)
        call = _fir_call(B, C, F, TF, orig, P, W_in, post_snake)
        out4 = call(xp, xp, M, a)
    # (B, F, P, C) -> (B, F*P, C): contiguous, free.
    return out4.reshape(B, F * P, C)


# ------------------------------------------------------------------ scalar-alpha snake on the signal

@functools.lru_cache(maxsize=None)
def _snake_signal_call(B, T):
    # Lane-dense layout: the 1-channel signal is processed as (B, 1, T) so the
    # time axis lives on lanes (no masked width-1 stores).
    def kernel(a_ref, x_ref, o_ref):
        a = a_ref[0]
        xv = x_ref[0]                             # (1, T)
        s = jnp.sin(a * xv)
        o_ref[0] = xv + s * s * (1.0 / a)

    return pl.pallas_call(
        kernel,
        out_shape=jax.ShapeDtypeStruct((B, 1, T), jnp.float32),
        grid=(B,),
        in_specs=[pl.BlockSpec(memory_space=pltpu.MemorySpace.SMEM),
                  pl.BlockSpec((1, 1, T), lambda b: (b, 0, 0))],
        out_specs=pl.BlockSpec((1, 1, T), lambda b: (b, 0, 0)),
        compiler_params=pltpu.CompilerParams(
            dimension_semantics=("parallel",), vmem_limit_bytes=_VMEM_LIMIT))


# ------------------------------------------------------------------ parameters

def _init_conv(key, Cin, Cout, K, bias=True, std=0.01):
    kw, kb = jax.random.split(key)
    w = jax.random.normal(kw, (K, Cin, Cout), jnp.float32) * std
    b = jax.random.normal(kb, (Cout,), jnp.float32) * std if bias else None
    return (w, b)


def init_generator_params(key, hps):
    keys = iter(jax.random.split(key, 256))
    p = {}
    M = hps["num_mels"]
    uic = hps["upsample_initial_channel"]

    p["enc1"] = _init_conv(next(keys), M + 1, 256, 5)
    p["enc2"] = _init_conv(next(keys), 256, 256, 5)
    p["alpha"] = jnp.array([5.0], jnp.float32)
    p["conv_pre"] = _init_conv(next(keys), M, uic, 7)

    p["ups"] = []
    p["alphas"] = [jnp.ones((uic,), jnp.float32)]
    p["resblocks"] = []
    ch = uic
    for i, (u, k) in enumerate(zip(hps["upsample_rates"], hps["upsample_kernel_sizes"])):
        cin = uic // 2 ** i
        cout = uic // 2 ** (i + 1)
        kw, kb = jax.random.split(next(keys))
        w_t = jax.random.normal(kw, (cin, cout, k), jnp.float32) * 0.01   # PyTorch layout
        b_t = jax.random.normal(kb, (cout,), jnp.float32) * 0.01
        p["ups"].append({"w": w_t, "b": b_t, "stride": u, "padding": (k - u) // 2})
        ch = cout
        p["alphas"].append(jnp.ones((ch,), jnp.float32))
        for krs, dil in zip(hps["resblock_kernel_sizes"], hps["resblock_dilation_sizes"]):
            blk = {"k": krs, "dil": tuple(dil), "c1": [], "c2": [], "a1": [], "a2": []}
            for _ in dil:
                blk["c1"].append(_init_conv(next(keys), ch, ch, krs))
                blk["c2"].append(_init_conv(next(keys), ch, ch, krs))
                blk["a1"].append(jnp.ones((ch,), jnp.float32))
                blk["a2"].append(jnp.ones((ch,), jnp.float32))
            p["resblocks"].append(blk)
    p["conv_post"] = _init_conv(next(keys), ch, 1, 7, bias=False)[0]
    return p


# ------------------------------------------------------------------ forward

def amp_block_forward(blk, x):
    k = blk["k"]
    for j, d in enumerate(blk["dil"]):
        # 2x up-resample with fused snake(a1) epilogue, then 2x down-resample.
        xt = kaiser_resample(x, "up2", alpha_post=blk["a1"][j])
        xt = kaiser_resample(xt, "down2")
        w1, b1 = blk["c1"][j]
        pad1 = d * (k - 1) // 2
        xt = conv1d(xt, w1, b1, dilation=d, pad_left=pad1, pad_right=pad1,
                    activation="snake", alpha_post=blk["a2"][j])
        w2, b2 = blk["c2"][j]
        pad2 = (k - 1) // 2
        x = conv1d(xt, w2, b2, dilation=1, pad_left=pad2, pad_right=pad2,
                   residual=x)                     # fused `xt + x`
    return x


def generator_forward(params, hps, x_ncw, pitch, g=None, uv=None):
    """x_ncw: (B, num_mels, T) NCW;  pitch: (B, T).  Returns NCW outputs."""
    B, M, T = x_ncw.shape
    num_upsamples = len(hps["upsample_rates"])
    num_kernels = len(hps["resblock_kernel_sizes"])

    x = jnp.transpose(x_ncw, (0, 2, 1))                       # (B, T, M)
    cij = jnp.concatenate([x, pitch[:, :, None]], axis=-1)    # cat([x, pitch.unsqueeze(1)], dim=1)

    h = conv1d(cij, *params["enc1"], pad_left=2, pad_right=2, activation="leaky_relu")
    hidden = conv1d(h, *params["enc2"], pad_left=2, pad_right=2, activation="leaky_relu")
    # TODO(synk): DDSP is undefined in the reference source; `hidden` would feed it.
    #             Kept for forward-pass parity; skip while DDSP remains a stub.
    del hidden

    T_up = T * int(np.prod(hps["upsample_rates"]))
    signal_ncw = _snake_signal_call(B, T_up)(
        params["alpha"], jnp.zeros((B, 1, T_up), jnp.float32))   # (B, 1, T_up)
    signal = signal_ncw.reshape(B, T_up, 1)                       # free reshape (C==1)

    y = conv1d(x, *params["conv_pre"], pad_left=3, pad_right=3)
    for i in range(num_upsamples):
        up = params["ups"][i]
        # snake(alphas[i]) is fused as the prologue of the polyphase upsampler.
        y = conv_transpose1d(y, up["w"], up["b"], stride=up["stride"],
                             padding=up["padding"], alpha_pre=params["alphas"][i])
        xs = None
        for j in range(num_kernels):
            out = amp_block_forward(params["resblocks"][i * num_kernels + j], y)
            xs = out if xs is None else xs + out
        y = xs / num_kernels

    # conv_post (bias=False) with fused tanh + signal add.
    y = conv1d(y, params["conv_post"], None, pad_left=3, pad_right=3,
               activation="tanh", residual=signal)
    y_ncw = jnp.transpose(y, (0, 2, 1))                       # (B, 1, T_up); C==1 so no data movement
    return y_ncw, signal_ncw


# ------------------------------------------------------------------ main

if __name__ == "__main__":
    hps = {
        "num_mels": 8,
        "upsample_initial_channel": 32,
        "upsample_rates": [2, 8],
        "upsample_kernel_sizes": [4, 16],
        "resblock_kernel_sizes": [3],
        "resblock_dilation_sizes": [[1, 3, 5]],
        "hop_size": 16,
        "sampling_rate": 16000,
    }

    key = jax.random.PRNGKey(0)
    kx, kp, kparam = jax.random.split(key, 3)
    B, M, T = 2, hps["num_mels"], 20
    x = jax.random.normal(kx, (B, M, T), jnp.float32)
    pitch = jax.random.uniform(kp, (B, T), jnp.float32, 100.0, 400.0)

    params = init_generator_params(kparam, hps)

    out, signal = generator_forward(params, hps, x, pitch)
    out = jax.block_until_ready(out)
    signal = jax.block_until_ready(signal)

    T_up = T * int(np.prod(hps["upsample_rates"]))
    assert out.shape == (B, 1, T_up), out.shape
    assert signal.shape == (B, 1, T_up), signal.shape
    assert bool(jnp.all(jnp.isfinite(out)))
    print("KERNEL_OK")
</pallas_src>

<mosaic_0001>
module attributes {stable_mosaic.version = 11 : i64} {
  func.func @kernel(%arg0: i32, %arg1: memref<1x24x9xf32, #tpu.memory_space<vmem>>, %arg2: memref<45x256xbf16, #tpu.memory_space<vmem>>, %arg3: memref<1x256xf32, #tpu.memory_space<vmem>>, %arg4: memref<1x9xf32, #tpu.memory_space<vmem>>, %arg5: memref<1x256xf32, #tpu.memory_space<vmem>>, %arg6: memref<1x20x256xf32, #tpu.memory_space<vmem>>) attributes {dimension_semantics = [#tpu.dimension_semantics<parallel>], iteration_bounds = array<i64: 2>, scalar_prefetch = 0 : i64, scratch_operands = 0 : i64, tpu.core_type = #tpu.core_type<tc>, window_params = [{transform_indices = @transform_0, window_bounds = array<i64: 1, 24, 9>}, {pipeline_mode = #tpu.pipeline_mode<synchronous>, transform_indices = @transform_1, window_bounds = array<i64: 45, 256>}, {pipeline_mode = #tpu.pipeline_mode<synchronous>, transform_indices = @transform_2, window_bounds = array<i64: 1, 256>}, {pipeline_mode = #tpu.pipeline_mode<synchronous>, transform_indices = @transform_3, window_bounds = array<i64: 1, 9>}, {pipeline_mode = #tpu.pipeline_mode<synchronous>, transform_indices = @transform_4, window_bounds = array<i64: 1, 256>}, {transform_indices = @transform_5, window_bounds = array<i64: 1, 20, 256>}]} {
    %c0 = arith.constant 0 : index
    %c0_0 = arith.constant 0 : index
    %c0_1 = arith.constant 0 : index
    %0 = vector.load %arg1[%c0, %c0_0, %c0_1] : memref<1x24x9xf32, #tpu.memory_space<vmem>>, vector<1x24x9xf32>
    %1 = vector.shape_cast %0 : vector<1x24x9xf32> to vector<24x9xf32>
    %2 = arith.truncf %1 : vector<24x9xf32> to vector<24x9xbf16>
    %3 = vector.extract_strided_slice %2 {offsets = [0, 0], sizes = [20, 9], strides = [1, 1]} : vector<24x9xbf16> to vector<20x9xbf16>
    %4 = vector.extract_strided_slice %2 {offsets = [1, 0], sizes = [20, 9], strides = [1, 1]} : vector<24x9xbf16> to vector<20x9xbf16>
    %5 = vector.extract_strided_slice %2 {offsets = [2, 0], sizes = [20, 9], strides = [1, 1]} : vector<24x9xbf16> to vector<20x9xbf16>
    %6 = vector.extract_strided_slice %2 {offsets = [3, 0], sizes = [20, 9], strides = [1, 1]} : vector<24x9xbf16> to vector<20x9xbf16>
    %7 = vector.extract_strided_slice %2 {offsets = [4, 0], sizes = [20, 9], strides = [1, 1]} : vector<24x9xbf16> to vector<20x9xbf16>
    %8 = tpu.concatenate %3, %4, %5, %6, %7 in 1 : vector<20x9xbf16>, vector<20x9xbf16>, vector<20x9xbf16>, vector<20x9xbf16>, vector<20x9xbf16> -> vector<20x45xbf16>
    %c0_2 = arith.constant 0 : index
    %c0_3 = arith.constant 0 : index
    %9 = vector.load %arg2[%c0_2, %c0_3] : memref<45x256xbf16, #tpu.memory_space<vmem>>, vector<45x256xbf16>
    %cst = arith.constant dense<0.000000e+00> : vector<20x256xf32>
    %10 = tpu.matmul %8, %9, %cst {dimension_numbers = #tpu.dot_dimension_numbers<[1], [0], [0], [1], [0, 0, 1, 1], [], []>} : vector<20x45xbf16>, vector<45x256xbf16>, vector<20x256xf32> -> vector<20x256xf32>
    %c0_4 = arith.constant 0 : index
    %c0_5 = arith.constant 0 : index
    %11 = vector.load %arg3[%c0_4, %c0_5] : memref<1x256xf32, #tpu.memory_space<vmem>>, vector<1x256xf32>
    %12 = vector.broadcast %11 : vector<1x256xf32> to vector<20x256xf32>
    %13 = arith.addf %10, %12 : vector<20x256xf32>
    %cst_6 = arith.constant 0.000000e+00 : f32
    %14 = vector.broadcast %cst_6 : f32 to vector<20x256xf32>
    %15 = arith.cmpf oge, %13, %14 : vector<20x256xf32>
    %cst_7 = arith.constant 0.00999999977 : f32
    %16 = vector.broadcast %cst_7 : f32 to vector<20x256xf32>
    %17 = arith.mulf %16, %13 : vector<20x256xf32>
    %18 = arith.select %15, %13, %17 : vector<20x256xi1>, vector<20x256xf32>
    %c0_8 = arith.constant 0 : index
    %c0_9 = arith.constant 0 : index
    %c0_10 = arith.constant 0 : index
    %19 = vector.load %arg6[%c0_8, %c0_9, %c0_10] : memref<1x20x256xf32, #tpu.memory_space<vmem>>, vector<1x20x256xf32>
    %20 = vector.shape_cast %19 : vector<1x20x256xf32> to vector<20x256xf32>
    %21 = vector.shape_cast %18 : vector<20x256xf32> to vector<1x20x256xf32>
    tpu.vector_store %arg6[%c0_8, %c0_9, %c0_10], %21 {strides = array<i32>} : memref<1x20x256xf32, #tpu.memory_space<vmem>>, vector<1x20x256xf32>,
    return
  }
  func.func @transform_0(%arg0: i32) -> (i32, i32, i32) {
    %c0_i32 = arith.constant 0 : i32
    %c0_i32_0 = arith.constant 0 : i32
    %c0_i32_1 = arith.constant 0 : i32
    return %arg0, %c0_i32, %c0_i32_0 : i32, i32, i32
  }
  func.func @transform_1(%arg0: i32) -> (i32, i32) {
    %c0_i32 = arith.constant 0 : i32
    %c0_i32_0 = arith.constant 0 : i32
    %c0_i32_1 = arith.constant 0 : i32
    return %c0_i32, %c0_i32_0 : i32, i32
  }
  func.func @transform_2(%arg0: i32) -> (i32, i32) {
    %c0_i32 = arith.constant 0 : i32
    %c0_i32_0 = arith.constant 0 : i32
    %c0_i32_1 = arith.constant 0 : i32
    return %c0_i32, %c0_i32_0 : i32, i32
  }
  func.func @transform_3(%arg0: i32) -> (i32, i32) {
    %c0_i32 = arith.constant 0 : i32
    %c0_i32_0 = arith.constant 0 : i32
    %c0_i32_1 = arith.constant 0 : i32
    return %c0_i32, %c0_i32_0 : i32, i32
  }
  func.func @transform_4(%arg0: i32) -> (i32, i32) {
    %c0_i32 = arith.constant 0 : i32
    %c0_i32_0 = arith.constant 0 : i32
    %c0_i32_1 = arith.constant 0 : i32
    return %c0_i32, %c0_i32_0 : i32, i32
  }
  func.func @transform_5(%arg0: i32) -> (i32, i32, i32) {
    %c0_i32 = arith.constant 0 : i32
    %c0_i32_0 = arith.constant 0 : i32
    %c0_i32_1 = arith.constant 0 : i32
    return %arg0, %c0_i32, %c0_i32_0 : i32, i32, i32
  }
}

</mosaic_0001>

<llo_original>
// kernel: tpu_custom_call.1
$region0: #{tpu_custom_call.1}
  #allocation0 [shape = 'u32[]', space=smem, size = 0x4, offset = 0x4, fixed_abs, tag = 'smem constant byte address 0x4 - core index']
  #allocation1 [shape = 'u32[144,128]{1,0:T(1,128)}', space=vmem, size = 0x12000, scoped, tag = 'internal scratch']
  %s0 = inlined_call_operand.vmem [shape: f32[2,24,9], index: 0, kind: input, shape index: {}]
  %s1 = inlined_call_operand.vmem [shape: bf16[45,256], index: 1, kind: input, shape index: {}]
  %s2 = inlined_call_operand.vmem [shape: f32[1,256], index: 2, kind: input, shape index: {}]
  %s3 = inlined_call_operand.vmem [shape: f32[1,9], index: 3, kind: input, shape index: {}]
  %s4 = inlined_call_operand.vmem [shape: f32[1,256], index: 4, kind: input, shape index: {}]
  %s5 = inlined_call_operand.vmem [shape: f32[2,20,256], index: 5, kind: output, shape index: {}]
  %s6 = sld [smem:[#allocation0]]
  $region53: #{tpu_custom_call.1} parent=0
    _
  %s8 = ssub.s32 1, %s6
  %s9 = scalar_select 0, %s8, %s6
  loop: start=0, step=1, limit=4
  $region2: #{tpu_custom_call.1} parent=0 // loop_pre_header
    _
  $region3: #{tpu_custom_call.1} parent=0 // loop_header
    %s11 = sphi 0, %s15
    %p12 = scmp.ge.s32.totalorder %s11, 4
    %s21 = sphi 0, %s23
    %s24 = sphi 0, %s21
    %s25 = sphi 0, %s24
    %s41 = sphi 0, %s25
    %s45 = sphi 0, %s45
    %s47 = sphi 0, %s45
    %s48 = sphi 0, %s47
    %s62 = sphi 0, %s48
    %s66 = sphi 0, %s66
    %s68 = sphi 0, %s66
    %s69 = sphi 0, %s68
    %s83 = sphi 0, %s69
    %s87 = sphi 0, %s87
    %s89 = sphi 0, %s87
    %s90 = sphi 0, %s89
    %s104 = sphi 0, %s90
    %s108 = sphi 0, %s108
    %s110 = sphi 0, %s108
    %s111 = sphi 0, %s110
    %s125 = sphi 0, %s111
    %s131 = sphi 0, %s133
    %s134 = sphi 0, %s131
    %s135 = sphi 0, %s134
    %s151 = sphi 0, %s135
  $region4: #{tpu_custom_call.1} parent=0 // loop_header_branch
    %14 = sbr.rel (%p12) target = $region8
  $region5: #{tpu_custom_call.1} parent=0 // loop_body
    %s16 = ssub.s32 %s11, 1
    %s17 = ssub.s32 %s11, 2
    %s18 = sadd.s32 %s11, 1
    %s19 = ssub.s32 %s11, %s18
    %p20 = scmp.eq.s32.totalorder %s19, 0
    %s22 = sadd.s32 %s21, 1
    %s23 = scalar_select %p20, %s21, %s22
    %p26 = pneg %p20
    %p27 = scmp.eq.s32.totalorder %s11, 1
    %p28 = por %p26, %p27
    %p29 = scmp.ne.s32.totalorder %s21, %s24
    %p30 = scmp.eq.s32.totalorder %s11, 0
    %p31 = por %p29, %p30
    %p32 = scmp.ne.s32.totalorder %s21, %s24
    %p33 = scmp.eq.s32.totalorder %s16, 1
    %p34 = por %p32, %p33
    %p35 = scmp.ne.s32.totalorder %s24, %s25
    %p36 = scmp.eq.s32.totalorder %s16, 0
    %p37 = por %p35, %p36
    %p38 = scmp.ne.s32.totalorder %s24, %s25
    %p39 = scmp.eq.s32.totalorder %s17, 1
    %p40 = por %p38, %p39
    %p42 = scmp.ne.s32.totalorder %s25, %s41
    %p43 = scmp.eq.s32.totalorder %s17, 0
    %p44 = por %p42, %p43
    %s46 = sadd.s32 %s45, 1
    %p49 = scmp.eq.s32.totalorder %s11, 1
    %p50 = scmp.ne.s32.totalorder %s45, %s47
    %p51 = scmp.eq.s32.totalorder %s11, 0
    %p52 = por %p50, %p51
    %p53 = scmp.ne.s32.totalorder %s45, %s47
    %p54 = scmp.eq.s32.totalorder %s16, 1
    %p55 = por %p53, %p54
    %p56 = scmp.ne.s32.totalorder %s47, %s48
    %p57 = scmp.eq.s32.totalorder %s16, 0
    %p58 = por %p56, %p57
    %p59 = scmp.ne.s32.totalorder %s47, %s48
    %p60 = scmp.eq.s32.totalorder %s17, 1
    %p61 = por %p59, %p60
    %p63 = scmp.ne.s32.totalorder %s48, %s62
    %p64 = scmp.eq.s32.totalorder %s17, 0
    %p65 = por %p63, %p64
    %s67 = sadd.s32 %s66, 1
    %p70 = scmp.eq.s32.totalorder %s11, 1
    %p71 = scmp.ne.s32.totalorder %s66, %s68
    %p72 = scmp.eq.s32.totalorder %s11, 0
    %p73 = por %p71, %p72
    %p74 = scmp.ne.s32.totalorder %s66, %s68
    %p75 = scmp.eq.s32.totalorder %s16, 1
    %p76 = por %p74, %p75
    %p77 = scmp.ne.s32.totalorder %s68, %s69
    %p78 = scmp.eq.s32.totalorder %s16, 0
    %p79 = por %p77, %p78
    %p80 = scmp.ne.s32.totalorder %s68, %s69
    %p81 = scmp.eq.s32.totalorder %s17, 1
    %p82 = por %p80, %p81
    %p84 = scmp.ne.s32.totalorder %s69, %s83
    %p85 = scmp.eq.s32.totalorder %s17, 0
    %p86 = por %p84, %p85
    %s88 = sadd.s32 %s87, 1
    %p91 = scmp.eq.s32.totalorder %s11, 1
    %p92 = scmp.ne.s32.totalorder %s87, %s89
    %p93 = scmp.eq.s32.totalorder %s11, 0
    %p94 = por %p92, %p93
    %p95 = scmp.ne.s32.totalorder %s87, %s89
    %p96 = scmp.eq.s32.totalorder %s16, 1
    %p97 = por %p95, %p96
    %p98 = scmp.ne.s32.totalorder %s89, %s90
    %p99 = scmp.eq.s32.totalorder %s16, 0
    %p100 = por %p98, %p99
    %p101 = scmp.ne.s32.totalorder %s89, %s90
    %p102 = scmp.eq.s32.totalorder %s17, 1
    %p103 = por %p101, %p102
    %p105 = scmp.ne.s32.totalorder %s90, %s104
    %p106 = scmp.eq.s32.totalorder %s17, 0
    %p107 = por %p105, %p106
    %s109 = sadd.s32 %s108, 1
    %p112 = scmp.eq.s32.totalorder %s11, 1
    %p113 = scmp.ne.s32.totalorder %s108, %s110
    %p114 = scmp.eq.s32.totalorder %s11, 0
    %p115 = por %p113, %p114
    %p116 = scmp.ne.s32.totalorder %s108, %s110
    %p117 = scmp.eq.s32.totalorder %s16, 1
    %p118 = por %p116, %p117
    %p119 = scmp.ne.s32.totalorder %s110, %s111
    %p120 = scmp.eq.s32.totalorder %s16, 0
    %p121 = por %p119, %p120
    %p122 = scmp.ne.s32.totalorder %s110, %s111
    %p123 = scmp.eq.s32.totalorder %s17, 1
    %p124 = por %p122, %p123
    %p126 = scmp.ne.s32.totalorder %s111, %s125
    %p127 = scmp.eq.s32.totalorder %s17, 0
    %p128 = por %p126, %p127
    %s129 = ssub.s32 %s11, %s18
    %p130 = scmp.eq.s32.totalorder %s129, 0
    %s132 = sadd.s32 %s131, 1
    %s133 = scalar_select %p130, %s131, %s132
    %p136 = pneg %p130
    %p137 = scmp.eq.s32.totalorder %s11, 1
    %p138 = por %p136, %p137
    %p139 = scmp.ne.s32.totalorder %s131, %s134
    %p140 = scmp.eq.s32.totalorder %s11, 0
    %p141 = por %p139, %p140
    %p142 = scmp.ne.s32.totalorder %s131, %s134
    %p143 = scmp.eq.s32.totalorder %s16, 1
    %p144 = por %p142, %p143
    %p145 = scmp.ne.s32.totalorder %s134, %s135
    %p146 = scmp.eq.s32.totalorder %s16, 0
    %p147 = por %p145, %p146
    %p148 = scmp.ne.s32.totalorder %s134, %s135
    %p149 = scmp.eq.s32.totalorder %s17, 1
    %p150 = por %p148, %p149
    %p152 = scmp.ne.s32.totalorder %s135, %s151
    %p153 = scmp.eq.s32.totalorder %s17, 0
    %p154 = por %p152, %p153
    %p155 = scmp.le.s32.totalorder 1, %s11
    %p156 = scmp.lt.s32.totalorder %s11, 3
    %p157 = pnand %p155, %p156
    %p158 = pneg %p157
    // Predicated region
    $region9: #{tpu_custom_call.1} parent=5 // pred_check
      _
    $region10: #{tpu_custom_call.1} parent=5 // pred_check_branch
      %160 = sbr.rel (%p157) target = $region12
    $region11: #{tpu_custom_call.1} parent=5 // pred_region
      %s161 = ssub.s32 %s11, 1
      // Predicated region
      $region13: #{tpu_custom_call.1} parent=11 // pred_check
        %p162 = pneg %p58
      $region14: #{tpu_custom_call.1} parent=11 // pred_check_branch
        %164 = sbr.rel (%p162) target = $region16
      $region15: #{tpu_custom_call.1} parent=11 // pred_region
        _
      $region16: #{tpu_custom_call.1} parent=11 // pred_fallthru
        _
      // Predicated region
      $region17: #{tpu_custom_call.1} parent=11 // pred_check
        %p165 = pneg %p79
      $region18: #{tpu_custom_call.1} parent=11 // pred_check_branch
        %167 = sbr.rel (%p165) target = $region20
      $region19: #{tpu_custom_call.1} parent=11 // pred_region
        _
      $region20: #{tpu_custom_call.1} parent=11 // pred_fallthru
        _
      // Predicated region
      $region21: #{tpu_custom_call.1} parent=11 // pred_check
        %p168 = pneg %p100
      $region22: #{tpu_custom_call.1} parent=11 // pred_check_branch
        %170 = sbr.rel (%p168) target = $region24
      $region23: #{tpu_custom_call.1} parent=11 // pred_region
        _
      $region24: #{tpu_custom_call.1} parent=11 // pred_fallthru
        _
      // Predicated region
      $region25: #{tpu_custom_call.1} parent=11 // pred_check
        %p171 = pneg %p121
      $region26: #{tpu_custom_call.1} parent=11 // pred_check_branch
        %173 = sbr.rel (%p171) target = $region28
      $region27: #{tpu_custom_call.1} parent=11 // pred_region
        _
      $region28: #{tpu_custom_call.1} parent=11 // pred_fallthru
        _
    $region12: #{tpu_custom_call.1} parent=5 // pred_fallthru
      _
    %p174 = scmp.lt.s32.totalorder %s11, 2
    // Predicated region
    $region29: #{tpu_custom_call.1} parent=5 // pred_check
      %p175 = pneg %p174
    $region30: #{tpu_custom_call.1} parent=5 // pred_check_branch
      %177 = sbr.rel (%p175) target = $region32
    $region31: #{tpu_custom_call.1} parent=5 // pred_region
      // Predicated region
      $region33: #{tpu_custom_call.1} parent=31 // pred_check
        %p178 = pneg %p31
      $region34: #{tpu_custom_call.1} parent=31 // pred_check_branch
        %180 = sbr.rel (%p178) target = $region36
      $region35: #{tpu_custom_call.1} parent=31 // pred_region
        %p181 = scmp.lt.s32.totalorder %s11, 1
        %s182 = scalar_select %p181, %s11, 1
        %s183 = smul.addr %s182, 3
        %s184 = smul.addr %s183, 8
        %s185 = scalar_lea.vmem %s0, %s184
      $region36: #{tpu_custom_call.1} parent=31 // pred_fallthru
        _
    $region32: #{tpu_custom_call.1} parent=5 // pred_fallthru
      _
    %p186 = scmp.le.s32.totalorder 1, %s11
    %p187 = scmp.lt.s32.totalorder %s11, 3
    %p188 = pnand %p186, %p187
    %p189 = pneg %p188
    // Predicated region
    $region37: #{tpu_custom_call.1} parent=5 // pred_check
      _
    $region38: #{tpu_custom_call.1} parent=5 // pred_check_branch
      %191 = sbr.rel (%p188) target = $region40
    $region39: #{tpu_custom_call.1} parent=5 // pred_region
      %s192 = ssub.s32 %s11, 1
      %p193 = scmp.lt.s32.totalorder %s16, 1
      %s194 = scalar_select %p193, %s16, 1
      %s195 = smul.addr %s194, 3
      %s196 = smul.addr %s195, 8
      %s197 = scalar_lea.vmem %s0, %s196
      %p198 = pneg %p37
      %p199 = pneg %p34
      %p200 = pneg %p58
      %p201 = pneg %p55
      %p202 = pneg %p79
      %p203 = pneg %p76
      %p204 = pneg %p100
      %p205 = pneg %p97
      %p206 = pneg %p121
      %p207 = pneg %p118
      %p208 = pneg %p147
      %p209 = pneg %p144
      %p210 = scmp.lt.s32.totalorder %s16, 1
      %s211 = scalar_select %p210, %s16, 1
      %s212 = smul.addr %s211, 6
      %s213 = smul.addr %s212, 8
      %s214 = scalar_lea.vmem %s5, %s213
      %p215 = scmp.lt.s32.totalorder %s16, 1
      %s216 = scalar_select %p215, %s16, 1
      %s217 = smul.addr %s216, 3
      %s218 = smul.addr %s217, 8
      %s219 = scalar_lea.vmem %s0, %s218
      %p220 = scmp.lt.s32.totalorder %s16, 1
      %s221 = scalar_select %p220, %s16, 1
      %s222 = smul.addr %s221, 6
      %s223 = smul.addr %s222, 8
      %s224 = scalar_lea.vmem %s5, %s223
      %v226 = vld [vmem:[%s219] sm:$0xff]
      %v227 = vld [vmem:[%s219 + $0x8] sm:$0xff]
      %v228 = vld [vmem:[%s219 + $0x10] sm:$0xff]
      %v229 = vpack.c.bf16 %v227, %v226
      %v230 = vpack.c.bf16 %v228, %v228
      %vm231 = vsmask.f32 7424
      %v233 = vshrl.u32 %v229, 16
      %v235 = vshll.u32 %v229, 16
      %v237 = vrot.slane %v235, 1
      %v238 = vor.u32 %v233, %v237
      %v240 = vshll.u32 %v230, 16
      %v242 = vrot.slane %v240, 1
      %v243 = vsel %vm231, %v238, %v242
      %v244 = vshrl.u32 %v230, 16
      %v246 = vor.u32 %v244, %v242
      %247 = vrot.lane.b32.xlu0 %v243, 9
      %v248 = vpop.permute.xlu0 %247
      %249 = vrot.lane.b32.xlu0 %v246, 9
      %v250 = vpop.permute.xlu0 %249
      %vm253 = vcmask 1046528
      %v254 = vrot.slane %v229, 1
      %v255 = vrot.slane %v230, 1
      %v256 = vsel %vm253, %v254, %v255
      %257 = vrot.lane.b32.xlu0 %v256, 18
      %v258 = vpop.permute.xlu0 %257
      %259 = vrot.lane.b32.xlu0 %v255, 18
      %v260 = vpop.permute.xlu0 %259
      %vm261 = vsmask.f32 6400
      %v262 = vrot.slane %v233, 1
      %v263 = vrot.slane %v235, 2
      %v264 = vor.u32 %v262, %v263
      %v265 = vrot.slane %v244, 1
      %v266 = vrot.slane %v240, 2
      %v267 = vor.u32 %v265, %v266
      %v268 = vsel %vm261, %v264, %v267
      %269 = vrot.lane.b32.xlu0 %v268, 27
      %v270 = vpop.permute.xlu0 %269
      %271 = vrot.lane.b32.xlu0 %v267, 27
      %v272 = vpop.permute.xlu0 %271
      %vm273 = vcmask 1045504
      %v274 = vrot.slane %v229, 2
      %v275 = vrot.slane %v230, 2
      %v276 = vsel %vm273, %v274, %v275
      %277 = vrot.lane.b32.xlu0 %v276, 36
      %v278 = vpop.permute.xlu0 %277
      %279 = vrot.lane.b32.xlu0 %v275, 36
      %v280 = vpop.permute.xlu0 %279
      %vm281 = vcmask 72704
      %v283 = vsel %vm281, %v229, %v248
      %v285 = vsel %vm281, %v230, %v250
      %vm286 = vcmask 146432
      %v288 = vsel %vm286, %v283, %v258
      %v290 = vsel %vm286, %v285, %v260
      %vm291 = vcmask 220160
      %v293 = vsel %vm291, %v288, %v270
      %v295 = vsel %vm291, %v290, %v272
      %vm296 = vcmask 293888
      %v298 = vsel %vm296, %v293, %v278
      %v300 = vsel %vm296, %v295, %v280
      %v301 = vld [vmem:[%s1] sm:$0xff]
      %v302 = vld [vmem:[%s1 + $0x8] sm:$0xff]
      %v303 = vld [vmem:[%s1 + $0x10] sm:$0xff]
      %v304 = vld [vmem:[%s1 + $0x18] sm:$0xff]
      %v305 = vld [vmem:[%s1 + $0x20] sm:$0xff]
      %v306 = vld [vmem:[%s1 + $0x28] sm:$0x77]
      %v307 = vld [vmem:[%s2] sm:$0x3]
      %v309 = vlaneseq
      %v310 = vshrl.u32 %v309, 7
      %v311 = vsub.s32 0, %v310
      %v312 = vrot.slane %v307, %v311
      %v313 = vlaneseq
      %v314 = vshrl.u32 %v313, 7
      %v315 = vsub.s32 1, %v314
      %v316 = vrot.slane %v307, %v315
      %v325 = vunpack.c.l.b16 %v301
      %v326 = vunpack.c.h.b16 %v301
      %v327 = vunpack.c.l.b16 %v302
      %v328 = vunpack.c.h.b16 %v302
      %v329 = vunpack.c.l.b16 %v303
      %v330 = vunpack.c.h.b16 %v303
      %v331 = vunpack.c.l.b16 %v304
      %v332 = vunpack.c.h.b16 %v304
      %v333 = vunpack.c.l.b16 %v305
      %v334 = vunpack.c.h.b16 %v305
      %v335 = vunpack.c.l.b16 %v306
      %v336 = vunpack.c.h.b16 %v306
      %v337 = vpack.c.b16 %v327, %v325
      %v338 = vpack.c.b16 %v328, %v326
      %v339 = vpack.c.b16 %v331, %v329
      %v340 = vpack.c.b16 %v332, %v330
      %v341 = vpack.c.b16 %v335, %v333
      %v342 = vpack.c.b16 %v336, %v334
      %vm347 = vcmask 367616
      %v348 = vsel %vm347, %v298, 0
      %v350 = vsel %vm347, %v300, 0
      %vm352 = vcmask 1045504
      %vm353 = vcmask 1046528
      %v354 = vsel %vm352, 4294967295, 65535
      %v355 = vsel %vm353, %v354, 0
      %v357 = vand.u32 %v341, %v355
      %v360 = vand.u32 %v342, %v355
      %362 = vmatprep.subr.bf16.mxu0 %v338
      %363 = vmatpush1.bf16.msra.mxu0 %v337
      %364 = vmatprep.subr.bf16.mxu0 %v340
      %365 = vmatpush1.bf16.msra.mxu0 %v339
      %366 = vmatprep.subr.bf16.mxu0 %v360
      %367 = vmatpush1.bf16.msra.mxu0 %v357
      %368 = vmatprep.subr.bf16.mxu0 0
      %369 = vmatpush1.bf16.msra.mxu0 0
      %370 = vmatprep.subr.bf16.mxu0 0
      %371 = vmatpush1.bf16.msra.mxu0 0
      %372 = vmatprep.subr.bf16.mxu0 0
      %373 = vmatpush1.bf16.msra.mxu0 0
      %374 = vmatprep.subr.bf16.mxu0 0
      %375 = vmatpush1.bf16.msra.mxu0 0
      %376 = vmatprep.subr.bf16.mxu0 0
      %377 = vmatpush1.bf16.msra.mxu0 0
      %378 = vmatprep.subr.bf16.mxu0 0
      %379 = vmatpush1.bf16.msra.mxu0 0
      %380 = vmatprep.subr.bf16.mxu0 0
      %381 = vmatpush1.bf16.msra.mxu0 0
      %382 = vmatprep.subr.bf16.mxu0 0
      %383 = vmatpush1.bf16.msra.mxu0 0
      %384 = vmatprep.subr.bf16.mxu0 0
      %385 = vmatpush1.bf16.msra.mxu0 0
      %386 = vmatprep.subr.bf16.mxu0 0
      %387 = vmatpush1.bf16.msra.mxu0 0
      %388 = vmatprep.subr.bf16.mxu0 0
      %389 = vmatpush1.bf16.msra.mxu0 0
      %390 = vmatprep.subr.bf16.mxu0 0
      %391 = vmatpush1.bf16.msra.mxu0 0
      %392 = vmatprep.subr.bf16.mxu0 0
      %393 = vmatpush1.bf16.msra.mxu0 0
      %394 = vmatprep.mubr.bf16.mxu0 0
      %395 = vmatmul.mubr.bf16.gmra.mrb[0].mxu0 %v348
      %v396 = vpop.f32.mrb[0].mxu0
      %v397 = vadd.f32 %v312, %v396
      %v398 = vpop.f32.mrb[0].mxu0
      %v399 = vadd.f32 %v316, %v398
      %v400 = vpop.f32.mrb[0].mxu0
      %v401 = vadd.f32 %v312, %v400
      %v402 = vpop.f32.mrb[0].mxu0
      %v403 = vadd.f32 %v316, %v402
      %404 = vmatprep.mubr.bf16.mxu0 0
      %405 = vmatmul.mubr.bf16.gmra.mrb[0].mxu0 %v350
      %v406 = vpop.f32.mrb[0].mxu0
      %v407 = vadd.f32 %v312, %v406
      %v408 = vpop.f32.mrb[0].mxu0
      %v409 = vadd.f32 %v316, %v408
      %v410 = vpop.f32.mrb[0].mxu0
      %v411 = vpop.f32.mrb[0].mxu0
      %412 = vdwg.mxu0
      %vm413 = vcmp.ge.f32.partialorder %v397, 0.0
      %vm414 = vcmp.ge.f32.partialorder %v399, 0.0
      %vm415 = vcmp.ge.f32.partialorder %v401, 0.0
      %vm416 = vcmp.ge.f32.partialorder %v403, 0.0
      %vm417 = vcmp.ge.f32.partialorder %v407, 0.0
      %vm418 = vcmp.ge.f32.partialorder %v409, 0.0
      %v419 = vmul.f32 %v397, 0.01
      %v420 = vmul.f32 %v399, 0.01
      %v421 = vmul.f32 %v401, 0.01
      %v422 = vmul.f32 %v403, 0.01
      %v423 = vmul.f32 %v407, 0.01
      %v424 = vmul.f32 %v409, 0.01
      %v425 = vsel %vm413, %v397, %v419
      %v426 = vsel %vm414, %v399, %v420
      %v427 = vsel %vm415, %v401, %v421
      %v428 = vsel %vm416, %v403, %v422
      %v429 = vsel %vm417, %v407, %v423
      %v430 = vsel %vm418, %v409, %v424
      %431 = vst [vmem:[%s224] sm:$0xff] %v425
      %432 = vst [vmem:[%s224 + $0x8] sm:$0xff] %v426
      %433 = vst [vmem:[%s224 + $0x10] sm:$0xff] %v427
      %434 = vst [vmem:[%s224 + $0x18] sm:$0xff] %v428
      %435 = vst [vmem:[%s224 + $0x20] sm:$0xf] %v429
      %436 = vst [vmem:[%s224 + $0x28] sm:$0xf] %v430
      %p437 = scmp.lt.s32.totalorder %s16, 1
      %s438 = scalar_select %p437, %s16, 1
      %s439 = smul.addr %s438, 6
      %s440 = smul.addr %s439, 8
      %s441 = scalar_lea.vmem %s5, %s440
      // Predicated region
      $region41: #{tpu_custom_call.1} parent=39 // pred_check
        %p442 = pneg %p144
      $region42: #{tpu_custom_call.1} parent=39 // pred_check_branch
        %444 = sbr.rel (%p442) target = $region44
      $region43: #{tpu_custom_call.1} parent=39 // pred_region
        _
      $region44: #{tpu_custom_call.1} parent=39 // pred_fallthru
        _
    $region40: #{tpu_custom_call.1} parent=5 // pred_fallthru
      _
    %p445 = scmp.le.s32.totalorder 2, %s11
    // Predicated region
    $region45: #{tpu_custom_call.1} parent=5 // pred_check
      %p446 = pneg %p445
    $region46: #{tpu_custom_call.1} parent=5 // pred_check_branch
      %448 = sbr.rel (%p446) target = $region48
    $region47: #{tpu_custom_call.1} parent=5 // pred_region
      %s449 = ssub.s32 %s11, 2
      // Predicated region
      $region49: #{tpu_custom_call.1} parent=47 // pred_check
        %p450 = pneg %p150
      $region50: #{tpu_custom_call.1} parent=47 // pred_check_branch
        %452 = sbr.rel (%p450) target = $region52
      $region51: #{tpu_custom_call.1} parent=47 // pred_region
        %p453 = scmp.lt.s32.totalorder %s17, 1
        %s454 = scalar_select %p453, %s17, 1
        %s455 = smul.addr %s454, 6
        %s456 = smul.addr %s455, 8
        %s457 = scalar_lea.vmem %s5, %s456
      $region52: #{tpu_custom_call.1} parent=47 // pred_fallthru
        _
    $region48: #{tpu_custom_call.1} parent=5 // pred_fallthru
      _
  $region6: #{tpu_custom_call.1} parent=0 // loop_footer
    %s15 = sadd.s32 1, %s11
  $region7: #{tpu_custom_call.1} parent=0 // loop_footer_branch
    %10 = sbr.rel target = $region3
  $region8: #{tpu_custom_call.1} parent=0 // loop_exit
    _

</llo_original>
